<compile_context>
chip_gen: v6e
topology: v6e:2x2x1
jax: 0.10.0
libtpu: 0.0.40
codegen_flags: <defaults>
</compile_context>

<pallas_src>
import functools

import jax
import jax.numpy as jnp
from jax import lax
from jax.experimental import pallas as pl
from jax.experimental.pallas import tpu as pltpu

LRELU_SLOPE = 0.1
_LANE = 128


def _round_up(x, m):
    return (x + m - 1) // m * m


def _vmem_capacity_bytes():
    try:
        return int(pltpu.get_tpu_info().vmem_capacity_bytes)
    except Exception:
        return 64 * 1024 * 1024           # conservative (v7x-sized) fallback


def _conv_kernel(x_ref, w_ref, b_ref, o_ref, *, K, stride, gm, t_tile, fold,
                 apply_lrelu, slope):
    """One (group-block, cout-tile, batch, time-tile) step of a grouped Conv1d.

    x_ref : (stride, gm, Cin_g, slab_len)  bf16 phase-split input slab
    w_ref : fold   -> (gm, co_t, K*Cin_g)  bf16 folded weights (resident)
            !fold  -> (gm, K, co_t, Cin_g) bf16 per-tap weights (resident)
    b_ref : (gm*co_t, 1)                   f32 bias (resident)
    o_ref : (gm*co_t, t_tile)              output (bf16 or f32)
    Identity used:  x_pad[s*t + k] == phase_{k % s}[t + k // s]
    """
    outs = []
    for j in range(gm):                              # gm is a trace-time const
        if fold:
            # im2col in VMEM: one big MXU contraction of depth K*Cin_g.
            parts = [x_ref[k % stride, j, :, pl.ds(k // stride, t_tile)]
                     for k in range(K)]
            xf = parts[0] if K == 1 else jnp.concatenate(parts, axis=0)
            acc = jnp.dot(w_ref[j], xf, preferred_element_type=jnp.float32)
        else:
            # Cin_g already >= full MXU depth: short K loop, local accumulation
            # (no per-tap VMEM scratch round-trips).
            acc = None
            for k in range(K):
                q, r = divmod(k, stride)
                xk = x_ref[r, j, :, pl.ds(q, t_tile)]
                c = jnp.dot(w_ref[j, k], xk, preferred_element_type=jnp.float32)
                acc = c if acc is None else acc + c
        outs.append(acc)
    out = outs[0] if gm == 1 else jnp.concatenate(outs, axis=0)
    out = out + b_ref[...]
    if apply_lrelu:
        out = jnp.where(out >= 0.0, out, slope * out)
    o_ref[...] = out.astype(o_ref.dtype)


def grouped_conv1d(x, w, b, *, stride, padding, groups, apply_lrelu=True,
                   slope=LRELU_SLOPE, out_dtype=jnp.float32, t_tile=None):
    """Grouped 1-D convolution with torch.nn.Conv1d semantics, fused bias and
    (optional) leaky-relu.   x: (B, Cin, T)  w: (Cout, Cin//groups, K)  b: (Cout,)
    """
    B, Cin, T = x.shape
    Cout, Cin_g, K = w.shape
    assert Cin == Cin_g * groups and Cout % groups == 0
    Cout_g = Cout // groups
    T_out = (T + 2 * padding - K) // stride + 1
    assert T_out >= 1

    # ---- per-generation sizing --------------------------------------------
    cap = _vmem_capacity_bytes()
    big_vmem = cap >= 96 * 1024 * 1024          # v5e/v6e (128 MiB) vs v7x (64)
    if t_tile is None:
        t_tile = 1024 if big_vmem else 512
    w_budget = (12 if big_vmem else 6) * 1024 * 1024
    vmem_cap = int(min(cap * 3 // 4, 96 * 1024 * 1024))

    Q = -(-K // stride)                          # taps per phase (ceil)
    tt = min(t_tile, _round_up(T_out, _LANE))    # output-time tile (128k)
    n_t = -(-T_out // tt)
    slab_len = _round_up(tt + Q - 1, _LANE)      # per-tile phase window

    # Fold K into the contraction whenever Cin_g alone under-fills the MXU.
    fold = (Cin_g < 256) and (K * Cin_g <= 4096)

    # ---- cout tiling (only the 1024x1024xK layers can exceed the budget) ---
    co_t = Cout_g
    while co_t % 2 == 0 and co_t > 8 and K * co_t * Cin_g * 2 > w_budget:
        co_t //= 2
    n_co = Cout_g // co_t

    out_itemsize = jnp.dtype(out_dtype).itemsize

    def _step_vmem(gm_):
        x_blk = stride * gm_ * _round_up(Cin_g, 16) * slab_len * 2
        if fold:
            w_blk = gm_ * _round_up(co_t, 16) * _round_up(K * Cin_g, _LANE) * 2
            tmp = gm_ * (_round_up(K * Cin_g, 16) * tt * 2 + co_t * tt * 4)
        else:
            w_blk = gm_ * K * _round_up(co_t, 16) * _round_up(Cin_g, _LANE) * 2
            tmp = gm_ * co_t * tt * 4 * 2
        o_blk = _round_up(gm_ * co_t, 16) * tt * out_itemsize
        b_blk = _round_up(gm_ * co_t, 8) * _LANE * 4
        return 2 * (x_blk + w_blk + o_blk + b_blk) + tmp

    # ---- merge several groups per grid step (amortize per-step overhead) ---
    gm = 1
    if n_co == 1 and groups > 1:
        while (gm * 2 <= min(groups, 8) and groups % (gm * 2) == 0
               and gm * 2 * co_t <= 256
               and _step_vmem(gm * 2) <= 24 * 1024 * 1024):
            gm *= 2
    G_outer = groups // gm

    vmem_limit = int(min(max(_step_vmem(gm) + (16 << 20), 32 << 20), vmem_cap))

    # ---- glue: pad -> strided phase slices -> per-tile slabs (one pass) ----
    xb = x if x.dtype == jnp.bfloat16 else x.astype(jnp.bfloat16)
    need_len = stride * ((n_t - 1) * tt + slab_len)
    pad_r = padding + max(0, need_len - (T + 2 * padding))
    x_pad = jnp.pad(xb, ((0, 0), (0, 0), (padding, pad_r)))
    slabs = []
    for t in range(n_t):
        base = stride * t * tt
        phs = [lax.slice_in_dim(x_pad, base + r,
                                base + r + stride * (slab_len - 1) + 1,
                                stride=stride, axis=2)
               for r in range(stride)]
        slabs.append(jnp.stack(phs, axis=1))        # (B, s, Cin, slab)
    x_slab = jnp.stack(slabs, axis=1)               # (B, n_t, s, Cin, slab)
    x_slab = x_slab.reshape(B, n_t, stride, groups, Cin_g, slab_len)

    # ---- weights / bias (tiny, reshaped once) ------------------------------
    wb = w.astype(jnp.bfloat16)
    if fold:
        wt = jnp.transpose(wb, (0, 2, 1)).reshape(Cout, K * Cin_g)   # k-major
        wt = wt.reshape(G_outer, gm, n_co, co_t, K * Cin_g)
        wt = jnp.transpose(wt, (0, 2, 1, 3, 4))     # (Go, n_co, gm, co_t, K*Cin_g)
        w_block = (None, None, gm, co_t, K * Cin_g)
        w_imap = lambda g, co, bi, t: (g, co, 0, 0, 0)
    else:
        wt = jnp.transpose(wb, (2, 0, 1))           # (K, Cout, Cin_g)
        wt = wt.reshape(K, G_outer, gm, n_co, co_t, Cin_g)
        wt = jnp.transpose(wt, (1, 3, 2, 0, 4, 5))  # (Go, n_co, gm, K, co_t, Cin_g)
        w_block = (None, None, gm, K, co_t, Cin_g)
        w_imap = lambda g, co, bi, t: (g, co, 0, 0, 0, 0)

    bt = b.astype(jnp.float32).reshape(G_outer, gm, n_co, co_t)
    bt = jnp.transpose(bt, (0, 2, 1, 3)).reshape(G_outer, n_co, gm * co_t, 1)

    kernel = functools.partial(_conv_kernel, K=K, stride=stride, gm=gm,
                               t_tile=tt, fold=fold,
                               apply_lrelu=apply_lrelu, slope=slope)
    out = pl.pallas_call(
        kernel,
        out_shape=jax.ShapeDtypeStruct((B, Cout, n_t * tt), out_dtype),
        grid=(G_outer, n_co, B, n_t),               # weights resident on (B, t)
        in_specs=[
            pl.BlockSpec((None, None, stride, gm, Cin_g, slab_len),
                         lambda g, co, bi, t: (bi, t, 0, g, 0, 0)),
            pl.BlockSpec(w_block, w_imap),
            pl.BlockSpec((None, None, gm * co_t, 1),
                         lambda g, co, bi, t: (g, co, 0, 0)),
        ],
        out_specs=pl.BlockSpec((None, gm * co_t, tt),
                               lambda g, co, bi, t: (bi, g * n_co + co, t)),
        compiler_params=pltpu.CompilerParams(
            dimension_semantics=("parallel", "parallel", "parallel", "parallel"),
            vmem_limit_bytes=vmem_limit),
    )(x_slab, wt, bt)
    return out[:, :, :T_out]


def avg_pool1d(x, kernel=4, stride=2, padding=2):
    """torch.nn.AvgPool1d(kernel, stride, padding), count_include_pad=True.
    Pure XLA strided-slice mean (memory-bound VPU work, no kernel launch)."""
    T = x.shape[-1]
    T_out = (T + 2 * padding - kernel) // stride + 1
    x_pad = jnp.pad(x, ((0, 0), (0, 0), (padding, padding)))
    acc = jnp.zeros(x.shape[:2] + (T_out,), x.dtype)
    for k in range(kernel):
        acc = acc + lax.slice_in_dim(x_pad, k, k + stride * (T_out - 1) + 1,
                                     stride=stride, axis=2)
    return acc / kernel


# (Cin, Cout, K, stride, groups, padding) for DiscriminatorS.convs + conv_post
_DISC_CONFIGS = [
    (1, 128, 15, 1, 1, 7),
    (128, 128, 41, 2, 4, 20),
    (128, 256, 41, 2, 16, 20),
    (256, 512, 41, 4, 16, 20),
    (512, 1024, 41, 4, 16, 20),
    (1024, 1024, 41, 1, 16, 20),
    (1024, 1024, 5, 1, 1, 2),
    (1024, 1, 3, 1, 1, 1),      # conv_post
]


def init_discriminator_params(key):
    params = []
    for i, (cin, cout, k, s, g, p) in enumerate(_DISC_CONFIGS):
        kw, kb = jax.random.split(jax.random.fold_in(key, i))
        w = 0.02 * jax.random.normal(kw, (cout, cin // g, k), jnp.float32)
        b = 0.01 * jax.random.normal(kb, (cout,), jnp.float32)
        params.append((w, b))
    return params


def discriminator_s(params, x):
    """Matches DiscriminatorS.forward: 7 convs + leaky_relu (fmap), conv_post,
    flatten.  Intermediate fmap activations are bf16 (HBM-traffic saving);
    conv_post output is f32."""
    fmap = []
    n = len(_DISC_CONFIGS)
    for i, ((w, b), (_ci, _co, _k, s, g, p)) in enumerate(zip(params,
                                                              _DISC_CONFIGS)):
        last = i == n - 1
        x = grouped_conv1d(x, w, b, stride=s, padding=p, groups=g,
                           apply_lrelu=not last,
                           out_dtype=jnp.float32 if last else jnp.bfloat16)
        fmap.append(x)
    x_flat = x.reshape(x.shape[0], -1)          # torch.flatten(x, 1, -1)
    return x_flat, fmap


def msd_forward(all_params, y):
    y_ds, fmaps = [], []
    for i, params in enumerate(all_params):
        if i != 0:
            y = avg_pool1d(y, kernel=4, stride=2, padding=2)
        y_d, fmap = discriminator_s(params, y)
        y_ds.append(y_d)
        fmaps.append(fmap)
    return y_ds, fmaps


def _conv1d_reference(x, w, b, *, stride, padding, groups):
    """f32 reference on the same bf16-rounded operands the kernel sees."""
    xr = x.astype(jnp.bfloat16).astype(jnp.float32)
    wr = w.astype(jnp.bfloat16).astype(jnp.float32)
    y = lax.conv_general_dilated(
        xr, wr, window_strides=(stride,), padding=[(padding, padding)],
        dimension_numbers=("NCH", "OIH", "NCH"),
        feature_group_count=groups, precision=lax.Precision.HIGHEST)
    return y + b[None, :, None]


if __name__ == "__main__":
    key = jax.random.PRNGKey(0)
    k_in, k_par, k_chk = jax.random.split(key, 3)

    # --- numerical spot-checks of the Pallas conv vs lax.conv ----------------
    # (cin, cout, K, stride, groups, pad, T): exercise folded MXU path,
    # group-merging, stride-4 phase split, cin_g==1, and the unfolded path.
    for case_i, (cin, cout, kk_, s, g, p, t) in enumerate([
            (1, 16, 15, 1, 1, 7, 96),        # folded, Cin_g == 1 (layer-1 like)
            (32, 64, 7, 2, 4, 3, 200),       # folded + group merge, stride 2
            (16, 32, 9, 4, 2, 4, 130),       # folded, stride 4
            (256, 16, 3, 1, 1, 1, 100)]):    # unfolded (Cin_g >= 256) path
        kcase = jax.random.fold_in(k_chk, case_i)
        kx, kw, kb = jax.random.split(kcase, 3)
        xc = jax.random.normal(kx, (2, cin, t), jnp.float32)
        wc = 0.05 * jax.random.normal(kw, (cout, cin // g, kk_), jnp.float32)
        bc = 0.01 * jax.random.normal(kb, (cout,), jnp.float32)
        got = grouped_conv1d(xc, wc, bc, stride=s, padding=p, groups=g,
                             apply_lrelu=False, out_dtype=jnp.float32)
        ref = _conv1d_reference(xc, wc, bc, stride=s, padding=p, groups=g)
        assert got.shape == ref.shape, (got.shape, ref.shape)
        err = float(jnp.max(jnp.abs(got - ref)))
        assert err < 5e-3, (case_i, err)

    # --- full 3-scale multi-scale-discriminator forward on a small waveform --
    y = jax.random.normal(k_in, (2, 1, 128), jnp.float32)
    all_params = [init_discriminator_params(jax.random.fold_in(k_par, d))
                  for d in range(3)]

    y_ds, fmaps = jax.jit(msd_forward)(all_params, y)
    jax.block_until_ready((y_ds, fmaps))

    assert len(y_ds) == 3 and len(fmaps) == 3
    assert all(len(fm) == 8 for fm in fmaps)
    print("KERNEL_OK")
</pallas_src>

<mosaic_0001>
module attributes {stable_mosaic.version = 11 : i64} {
  func.func @_conv_kernel(%arg0: i32, %arg1: i32, %arg2: i32, %arg3: i32, %arg4: memref<1x1x1x1x1x256xbf16, #tpu.memory_space<vmem>>, %arg5: memref<1x1x1x16x15xbf16, #tpu.memory_space<vmem>>, %arg6: memref<1x1x16x1xf32, #tpu.memory_space<vmem>>, %arg7: memref<1x16x128xf32, #tpu.memory_space<vmem>>) attributes {dimension_semantics = [#tpu.dimension_semantics<parallel>, #tpu.dimension_semantics<parallel>, #tpu.dimension_semantics<parallel>, #tpu.dimension_semantics<parallel>], iteration_bounds = array<i64: 1, 1, 2, 1>, scalar_prefetch = 0 : i64, scratch_operands = 0 : i64, tpu.core_type = #tpu.core_type<tc>, window_params = [{transform_indices = @transform_0, window_bounds = array<i64: 1, 1, 1, 1, 1, 256>}, {transform_indices = @transform_1, window_bounds = array<i64: 1, 1, 1, 16, 15>}, {transform_indices = @transform_2, window_bounds = array<i64: 1, 1, 16, 1>}, {transform_indices = @transform_3, window_bounds = array<i64: 1, 16, 128>}]} {
    %c0 = arith.constant 0 : index
    %c0_0 = arith.constant 0 : index
    %c0_1 = arith.constant 0 : index
    %c0_2 = arith.constant 0 : index
    %c0_3 = arith.constant 0 : index
    %c0_4 = arith.constant 0 : index
    %0 = vector.load %arg4[%c0, %c0_0, %c0_1, %c0_2, %c0_3, %c0_4] : memref<1x1x1x1x1x256xbf16, #tpu.memory_space<vmem>>, vector<1x1x1x1x1x128xbf16>
    %1 = vector.shape_cast %0 : vector<1x1x1x1x1x128xbf16> to vector<1x128xbf16>
    %c0_5 = arith.constant 0 : index
    %c0_6 = arith.constant 0 : index
    %c0_7 = arith.constant 0 : index
    %c0_8 = arith.constant 0 : index
    %c0_9 = arith.constant 0 : index
    %c1 = arith.constant 1 : index
    %2 = vector.load %arg4[%c0_5, %c0_6, %c0_7, %c0_8, %c0_9, %c1] : memref<1x1x1x1x1x256xbf16, #tpu.memory_space<vmem>>, vector<1x1x1x1x1x128xbf16>
    %3 = vector.shape_cast %2 : vector<1x1x1x1x1x128xbf16> to vector<1x128xbf16>
    %c0_10 = arith.constant 0 : index
    %c0_11 = arith.constant 0 : index
    %c0_12 = arith.constant 0 : index
    %c0_13 = arith.constant 0 : index
    %c0_14 = arith.constant 0 : index
    %c2 = arith.constant 2 : index
    %4 = vector.load %arg4[%c0_10, %c0_11, %c0_12, %c0_13, %c0_14, %c2] : memref<1x1x1x1x1x256xbf16, #tpu.memory_space<vmem>>, vector<1x1x1x1x1x128xbf16>
    %5 = vector.shape_cast %4 : vector<1x1x1x1x1x128xbf16> to vector<1x128xbf16>
    %c0_15 = arith.constant 0 : index
    %c0_16 = arith.constant 0 : index
    %c0_17 = arith.constant 0 : index
    %c0_18 = arith.constant 0 : index
    %c0_19 = arith.constant 0 : index
    %c3 = arith.constant 3 : index
    %6 = vector.load %arg4[%c0_15, %c0_16, %c0_17, %c0_18, %c0_19, %c3] : memref<1x1x1x1x1x256xbf16, #tpu.memory_space<vmem>>, vector<1x1x1x1x1x128xbf16>
    %7 = vector.shape_cast %6 : vector<1x1x1x1x1x128xbf16> to vector<1x128xbf16>
    %c0_20 = arith.constant 0 : index
    %c0_21 = arith.constant 0 : index
    %c0_22 = arith.constant 0 : index
    %c0_23 = arith.constant 0 : index
    %c0_24 = arith.constant 0 : index
    %c4 = arith.constant 4 : index
    %8 = vector.load %arg4[%c0_20, %c0_21, %c0_22, %c0_23, %c0_24, %c4] : memref<1x1x1x1x1x256xbf16, #tpu.memory_space<vmem>>, vector<1x1x1x1x1x128xbf16>
    %9 = vector.shape_cast %8 : vector<1x1x1x1x1x128xbf16> to vector<1x128xbf16>
    %c0_25 = arith.constant 0 : index
    %c0_26 = arith.constant 0 : index
    %c0_27 = arith.constant 0 : index
    %c0_28 = arith.constant 0 : index
    %c0_29 = arith.constant 0 : index
    %c5 = arith.constant 5 : index
    %10 = vector.load %arg4[%c0_25, %c0_26, %c0_27, %c0_28, %c0_29, %c5] : memref<1x1x1x1x1x256xbf16, #tpu.memory_space<vmem>>, vector<1x1x1x1x1x128xbf16>
    %11 = vector.shape_cast %10 : vector<1x1x1x1x1x128xbf16> to vector<1x128xbf16>
    %c0_30 = arith.constant 0 : index
    %c0_31 = arith.constant 0 : index
    %c0_32 = arith.constant 0 : index
    %c0_33 = arith.constant 0 : index
    %c0_34 = arith.constant 0 : index
    %c6 = arith.constant 6 : index
    %12 = vector.load %arg4[%c0_30, %c0_31, %c0_32, %c0_33, %c0_34, %c6] : memref<1x1x1x1x1x256xbf16, #tpu.memory_space<vmem>>, vector<1x1x1x1x1x128xbf16>
    %13 = vector.shape_cast %12 : vector<1x1x1x1x1x128xbf16> to vector<1x128xbf16>
    %c0_35 = arith.constant 0 : index
    %c0_36 = arith.constant 0 : index
    %c0_37 = arith.constant 0 : index
    %c0_38 = arith.constant 0 : index
    %c0_39 = arith.constant 0 : index
    %c7 = arith.constant 7 : index
    %14 = vector.load %arg4[%c0_35, %c0_36, %c0_37, %c0_38, %c0_39, %c7] : memref<1x1x1x1x1x256xbf16, #tpu.memory_space<vmem>>, vector<1x1x1x1x1x128xbf16>
    %15 = vector.shape_cast %14 : vector<1x1x1x1x1x128xbf16> to vector<1x128xbf16>
    %c0_40 = arith.constant 0 : index
    %c0_41 = arith.constant 0 : index
    %c0_42 = arith.constant 0 : index
    %c0_43 = arith.constant 0 : index
    %c0_44 = arith.constant 0 : index
    %c8 = arith.constant 8 : index
    %16 = vector.load %arg4[%c0_40, %c0_41, %c0_42, %c0_43, %c0_44, %c8] : memref<1x1x1x1x1x256xbf16, #tpu.memory_space<vmem>>, vector<1x1x1x1x1x128xbf16>
    %17 = vector.shape_cast %16 : vector<1x1x1x1x1x128xbf16> to vector<1x128xbf16>
    %c0_45 = arith.constant 0 : index
    %c0_46 = arith.constant 0 : index
    %c0_47 = arith.constant 0 : index
    %c0_48 = arith.constant 0 : index
    %c0_49 = arith.constant 0 : index
    %c9 = arith.constant 9 : index
    %18 = vector.load %arg4[%c0_45, %c0_46, %c0_47, %c0_48, %c0_49, %c9] : memref<1x1x1x1x1x256xbf16, #tpu.memory_space<vmem>>, vector<1x1x1x1x1x128xbf16>
    %19 = vector.shape_cast %18 : vector<1x1x1x1x1x128xbf16> to vector<1x128xbf16>
    %c0_50 = arith.constant 0 : index
    %c0_51 = arith.constant 0 : index
    %c0_52 = arith.constant 0 : index
    %c0_53 = arith.constant 0 : index
    %c0_54 = arith.constant 0 : index
    %c10 = arith.constant 10 : index
    %20 = vector.load %arg4[%c0_50, %c0_51, %c0_52, %c0_53, %c0_54, %c10] : memref<1x1x1x1x1x256xbf16, #tpu.memory_space<vmem>>, vector<1x1x1x1x1x128xbf16>
    %21 = vector.shape_cast %20 : vector<1x1x1x1x1x128xbf16> to vector<1x128xbf16>
    %c0_55 = arith.constant 0 : index
    %c0_56 = arith.constant 0 : index
    %c0_57 = arith.constant 0 : index
    %c0_58 = arith.constant 0 : index
    %c0_59 = arith.constant 0 : index
    %c11 = arith.constant 11 : index
    %22 = vector.load %arg4[%c0_55, %c0_56, %c0_57, %c0_58, %c0_59, %c11] : memref<1x1x1x1x1x256xbf16, #tpu.memory_space<vmem>>, vector<1x1x1x1x1x128xbf16>
    %23 = vector.shape_cast %22 : vector<1x1x1x1x1x128xbf16> to vector<1x128xbf16>
    %c0_60 = arith.constant 0 : index
    %c0_61 = arith.constant 0 : index
    %c0_62 = arith.constant 0 : index
    %c0_63 = arith.constant 0 : index
    %c0_64 = arith.constant 0 : index
    %c12 = arith.constant 12 : index
    %24 = vector.load %arg4[%c0_60, %c0_61, %c0_62, %c0_63, %c0_64, %c12] : memref<1x1x1x1x1x256xbf16, #tpu.memory_space<vmem>>, vector<1x1x1x1x1x128xbf16>
    %25 = vector.shape_cast %24 : vector<1x1x1x1x1x128xbf16> to vector<1x128xbf16>
    %c0_65 = arith.constant 0 : index
    %c0_66 = arith.constant 0 : index
    %c0_67 = arith.constant 0 : index
    %c0_68 = arith.constant 0 : index
    %c0_69 = arith.constant 0 : index
    %c13 = arith.constant 13 : index
    %26 = vector.load %arg4[%c0_65, %c0_66, %c0_67, %c0_68, %c0_69, %c13] : memref<1x1x1x1x1x256xbf16, #tpu.memory_space<vmem>>, vector<1x1x1x1x1x128xbf16>
    %27 = vector.shape_cast %26 : vector<1x1x1x1x1x128xbf16> to vector<1x128xbf16>
    %c0_70 = arith.constant 0 : index
    %c0_71 = arith.constant 0 : index
    %c0_72 = arith.constant 0 : index
    %c0_73 = arith.constant 0 : index
    %c0_74 = arith.constant 0 : index
    %c14 = arith.constant 14 : index
    %28 = vector.load %arg4[%c0_70, %c0_71, %c0_72, %c0_73, %c0_74, %c14] : memref<1x1x1x1x1x256xbf16, #tpu.memory_space<vmem>>, vector<1x1x1x1x1x128xbf16>
    %29 = vector.shape_cast %28 : vector<1x1x1x1x1x128xbf16> to vector<1x128xbf16>
    %30 = tpu.concatenate %1, %3, %5, %7, %9, %11, %13, %15, %17, %19, %21, %23, %25, %27, %29 in 0 : vector<1x128xbf16>, vector<1x128xbf16>, vector<1x128xbf16>, vector<1x128xbf16>, vector<1x128xbf16>, vector<1x128xbf16>, vector<1x128xbf16>, vector<1x128xbf16>, vector<1x128xbf16>, vector<1x128xbf16>, vector<1x128xbf16>, vector<1x128xbf16>, vector<1x128xbf16>, vector<1x128xbf16>, vector<1x128xbf16> -> vector<15x128xbf16>
    %c0_75 = arith.constant 0 : index
    %c0_76 = arith.constant 0 : index
    %c0_77 = arith.constant 0 : index
    %c0_78 = arith.constant 0 : index
    %c0_79 = arith.constant 0 : index
    %31 = vector.load %arg5[%c0_75, %c0_76, %c0_77, %c0_78, %c0_79] : memref<1x1x1x16x15xbf16, #tpu.memory_space<vmem>>, vector<1x1x1x16x15xbf16>
    %32 = vector.shape_cast %31 : vector<1x1x1x16x15xbf16> to vector<16x15xbf16>
    %cst = arith.constant dense<0.000000e+00> : vector<16x128xf32>
    %33 = tpu.matmul %32, %30, %cst {dimension_numbers = #tpu.dot_dimension_numbers<[1], [0], [0], [1], [0, 0, 1, 1], [], []>} : vector<16x15xbf16>, vector<15x128xbf16>, vector<16x128xf32> -> vector<16x128xf32>
    %c0_80 = arith.constant 0 : index
    %c0_81 = arith.constant 0 : index
    %c0_82 = arith.constant 0 : index
    %c0_83 = arith.constant 0 : index
    %34 = vector.load %arg6[%c0_80, %c0_81, %c0_82, %c0_83] : memref<1x1x16x1xf32, #tpu.memory_space<vmem>>, vector<1x1x16x1xf32>
    %35 = vector.shape_cast %34 : vector<1x1x16x1xf32> to vector<16x1xf32>
    %36 = vector.broadcast %35 : vector<16x1xf32> to vector<16x128xf32>
    %37 = arith.addf %33, %36 : vector<16x128xf32>
    %c0_84 = arith.constant 0 : index
    %c0_85 = arith.constant 0 : index
    %c0_86 = arith.constant 0 : index
    %38 = vector.load %arg7[%c0_84, %c0_85, %c0_86] : memref<1x16x128xf32, #tpu.memory_space<vmem>>, vector<1x16x128xf32>
    %39 = vector.shape_cast %38 : vector<1x16x128xf32> to vector<16x128xf32>
    %40 = vector.shape_cast %37 : vector<16x128xf32> to vector<1x16x128xf32>
    tpu.vector_store %arg7[%c0_84, %c0_85, %c0_86], %40 {strides = array<i32>} : memref<1x16x128xf32, #tpu.memory_space<vmem>>, vector<1x16x128xf32>,
    return
  }
  func.func @transform_0(%arg0: i32, %arg1: i32, %arg2: i32, %arg3: i32) -> (i32, i32, i32, i32, i32, i32) {
    %c0_i32 = arith.constant 0 : i32
    %c0_i32_0 = arith.constant 0 : i32
    %c0_i32_1 = arith.constant 0 : i32
    %c0_i32_2 = arith.constant 0 : i32
    return %arg2, %arg3, %c0_i32, %arg0, %c0_i32_0, %c0_i32_1 : i32, i32, i32, i32, i32, i32
  }
  func.func @transform_1(%arg0: i32, %arg1: i32, %arg2: i32, %arg3: i32) -> (i32, i32, i32, i32, i32) {
    %c0_i32 = arith.constant 0 : i32
    %c0_i32_0 = arith.constant 0 : i32
    %c0_i32_1 = arith.constant 0 : i32
    %c0_i32_2 = arith.constant 0 : i32
    return %arg0, %arg1, %c0_i32, %c0_i32_0, %c0_i32_1 : i32, i32, i32, i32, i32
  }
  func.func @transform_2(%arg0: i32, %arg1: i32, %arg2: i32, %arg3: i32) -> (i32, i32, i32, i32) {
    %c0_i32 = arith.constant 0 : i32
    %c0_i32_0 = arith.constant 0 : i32
    %c0_i32_1 = arith.constant 0 : i32
    return %arg0, %arg1, %c0_i32, %c0_i32_0 : i32, i32, i32, i32
  }
  func.func @transform_3(%arg0: i32, %arg1: i32, %arg2: i32, %arg3: i32) -> (i32, i32, i32) {
    %c1_i32 = arith.constant 1 : i32
    %0 = arith.muli %arg0, %c1_i32 : i32
    %1 = arith.addi %0, %arg1 : i32
    %c0_i32 = arith.constant 0 : i32
    return %arg2, %1, %arg3 : i32, i32, i32
  }
}

</mosaic_0001>

<llo_original>
// kernel: tpu_custom_call.1
$region0: #{tpu_custom_call.1}
  #allocation0 [shape = 'u32[]', space=smem, size = 0x4, offset = 0x4, fixed_abs, tag = 'smem constant byte address 0x4 - core index']
  #allocation1 [shape = 'u32[144,128]{1,0:T(1,128)}', space=vmem, size = 0x12000, scoped, tag = 'internal scratch']
  %s0 = inlined_call_operand.vmem [shape: bf16[2,1,1,1,1,256], index: 0, kind: input, shape index: {}]
  %s1 = inlined_call_operand.vmem [shape: bf16[1,1,1,16,15], index: 1, kind: input, shape index: {}]
  %s2 = inlined_call_operand.vmem [shape: f32[1,1,16,1], index: 2, kind: input, shape index: {}]
  %s3 = inlined_call_operand.hbm [shape: f32[2,16,128], index: 3, kind: output, shape index: {}]
  %s4 = sld [smem:[#allocation0]]
  $region45: #{tpu_custom_call.1} parent=0
    _
  %s6 = ssub.s32 1, %s4
  %s7 = scalar_select 0, %s6, %s4
  $region1: #{tpu_custom_call.1} parent=0
    #allocation2 [shape = 'u8[16384]{0}', space=vmem, size = 0x4000, scoped, tag = 'output window, operand 0']
    #allocation3 [shape = 's32[2]{0}', space=sflag, size = 0x8, scoped, tag = 'scoped memory for tpu_custom_call.1']
    %8 = vsyncpa [#allocation3], 0
    %s9 = scalar_lea.sflag [#allocation3], 1
    %10 = vsyncpa %s9, 0
    loop: start=0, step=1, limit=4
    $region2: #{tpu_custom_call.1} parent=1 // loop_pre_header
      _
    $region3: #{tpu_custom_call.1} parent=1 // loop_header
      %s12 = sphi 0, %s16
      %p13 = scmp.ge.s32.totalorder %s12, 4
      %s19 = sphi 0, %s45
      %s20 = sphi 0, %s41
      %s21 = sphi 0, %s37
      %s22 = sphi 0, %s33
      %s23 = sphi 0, %s19
      %s24 = sphi 0, %s20
      %s25 = sphi 0, %s21
      %s26 = sphi 0, %s22
      %s27 = sphi 0, %s23
      %s28 = sphi 0, %s24
      %s29 = sphi 0, %s25
      %s30 = sphi 0, %s26
      %s52 = sphi 0, %s54
      %s55 = sphi 0, %s52
      %s56 = sphi 0, %s55
      %s72 = sphi 0, %s56
      %s80 = sphi 0, %s82
      %s83 = sphi 0, %s80
      %s84 = sphi 0, %s83
      %s100 = sphi 0, %s84
      %s108 = sphi 0, %s110
      %s111 = sphi 0, %s108
      %s112 = sphi 0, %s111
      %s128 = sphi 0, %s112
      %s140 = sphi 0, %s142
      %s143 = sphi 0, %s140
      %s144 = sphi 0, %s143
      %s160 = sphi 0, %s144
    $region4: #{tpu_custom_call.1} parent=1 // loop_header_branch
      %15 = sbr.rel (%p13) target = $region8
    $region5: #{tpu_custom_call.1} parent=1 // loop_body
      %s17 = ssub.s32 %s12, 1
      %s18 = ssub.s32 %s12, 2
      %s31 = sadd.s32 1, %s22
      %p32 = scmp.ge.s32.totalorder %s31, 1
      %s33 = scalar_select %p32, 0, %s31
      %s34 = sadd.s32 1, %s21
      %s35 = scalar_select %p32, %s34, %s21
      %p36 = scmp.ge.s32.totalorder %s35, 2
      %s37 = scalar_select %p36, 0, %s35
      %s38 = sadd.s32 1, %s20
      %s39 = scalar_select %p36, %s38, %s20
      %p40 = scmp.ge.s32.totalorder %s39, 1
      %s41 = scalar_select %p40, 0, %s39
      %s42 = sadd.s32 1, %s19
      %s43 = scalar_select %p40, %s42, %s19
      %p44 = scmp.ge.s32.totalorder %s43, 1
      %s45 = scalar_select %p44, 0, %s43
      %s46 = ssub.s32 %s21, %s37
      %s47 = ssub.s32 %s22, %s33
      %s48 = sor.u32 %s46, %s47
      %s49 = ssub.s32 %s19, %s45
      %s50 = sor.u32 %s48, %s49
      %p51 = scmp.eq.s32.totalorder %s50, 0
      %s53 = sadd.s32 %s52, 1
      %s54 = scalar_select %p51, %s52, %s53
      %p57 = pneg %p51
      %p58 = scmp.eq.s32.totalorder %s12, 1
      %p59 = por %p57, %p58
      %p60 = scmp.ne.s32.totalorder %s52, %s55
      %p61 = scmp.eq.s32.totalorder %s12, 0
      %p62 = por %p60, %p61
      %p63 = scmp.ne.s32.totalorder %s52, %s55
      %p64 = scmp.eq.s32.totalorder %s17, 1
      %p65 = por %p63, %p64
      %p66 = scmp.ne.s32.totalorder %s55, %s56
      %p67 = scmp.eq.s32.totalorder %s17, 0
      %p68 = por %p66, %p67
      %p69 = scmp.ne.s32.totalorder %s55, %s56
      %p70 = scmp.eq.s32.totalorder %s18, 1
      %p71 = por %p69, %p70
      %p73 = scmp.ne.s32.totalorder %s56, %s72
      %p74 = scmp.eq.s32.totalorder %s18, 0
      %p75 = por %p73, %p74
      %s76 = ssub.s32 %s19, %s45
      %s77 = ssub.s32 %s20, %s41
      %s78 = sor.u32 %s76, %s77
      %p79 = scmp.eq.s32.totalorder %s78, 0
      %s81 = sadd.s32 %s80, 1
      %s82 = scalar_select %p79, %s80, %s81
      %p85 = pneg %p79
      %p86 = scmp.eq.s32.totalorder %s12, 1
      %p87 = por %p85, %p86
      %p88 = scmp.ne.s32.totalorder %s80, %s83
      %p89 = scmp.eq.s32.totalorder %s12, 0
      %p90 = por %p88, %p89
      %p91 = scmp.ne.s32.totalorder %s80, %s83
      %p92 = scmp.eq.s32.totalorder %s17, 1
      %p93 = por %p91, %p92
      %p94 = scmp.ne.s32.totalorder %s83, %s84
      %p95 = scmp.eq.s32.totalorder %s17, 0
      %p96 = por %p94, %p95
      %p97 = scmp.ne.s32.totalorder %s83, %s84
      %p98 = scmp.eq.s32.totalorder %s18, 1
      %p99 = por %p97, %p98
      %p101 = scmp.ne.s32.totalorder %s84, %s100
      %p102 = scmp.eq.s32.totalorder %s18, 0
      %p103 = por %p101, %p102
      %s104 = ssub.s32 %s19, %s45
      %s105 = ssub.s32 %s20, %s41
      %s106 = sor.u32 %s104, %s105
      %p107 = scmp.eq.s32.totalorder %s106, 0
      %s109 = sadd.s32 %s108, 1
      %s110 = scalar_select %p107, %s108, %s109
      %p113 = pneg %p107
      %p114 = scmp.eq.s32.totalorder %s12, 1
      %p115 = por %p113, %p114
      %p116 = scmp.ne.s32.totalorder %s108, %s111
      %p117 = scmp.eq.s32.totalorder %s12, 0
      %p118 = por %p116, %p117
      %p119 = scmp.ne.s32.totalorder %s108, %s111
      %p120 = scmp.eq.s32.totalorder %s17, 1
      %p121 = por %p119, %p120
      %p122 = scmp.ne.s32.totalorder %s111, %s112
      %p123 = scmp.eq.s32.totalorder %s17, 0
      %p124 = por %p122, %p123
      %p125 = scmp.ne.s32.totalorder %s111, %s112
      %p126 = scmp.eq.s32.totalorder %s18, 1
      %p127 = por %p125, %p126
      %p129 = scmp.ne.s32.totalorder %s112, %s128
      %p130 = scmp.eq.s32.totalorder %s18, 0
      %p131 = por %p129, %p130
      %s132 = sadd.s32 %s19, %s20
      %s133 = sadd.s32 %s45, %s41
      %s134 = ssub.s32 %s21, %s37
      %s135 = ssub.s32 %s132, %s133
      %s136 = sor.u32 %s134, %s135
      %s137 = ssub.s32 %s22, %s33
      %s138 = sor.u32 %s136, %s137
      %p139 = scmp.eq.s32.totalorder %s138, 0
      %s141 = sadd.s32 %s140, 1
      %s142 = scalar_select %p139, %s140, %s141
      %p145 = pneg %p139
      %p146 = scmp.eq.s32.totalorder %s12, 1
      %p147 = por %p145, %p146
      %p148 = scmp.ne.s32.totalorder %s140, %s143
      %p149 = scmp.eq.s32.totalorder %s12, 0
      %p150 = por %p148, %p149
      %p151 = scmp.ne.s32.totalorder %s140, %s143
      %p152 = scmp.eq.s32.totalorder %s17, 1
      %p153 = por %p151, %p152
      %p154 = scmp.ne.s32.totalorder %s143, %s144
      %p155 = scmp.eq.s32.totalorder %s17, 0
      %p156 = por %p154, %p155
      %p157 = scmp.ne.s32.totalorder %s143, %s144
      %p158 = scmp.eq.s32.totalorder %s18, 1
      %p159 = por %p157, %p158
      %p161 = scmp.ne.s32.totalorder %s144, %s160
      %p162 = scmp.eq.s32.totalorder %s18, 0
      %p163 = por %p161, %p162
      %p164 = scmp.le.s32.totalorder 1, %s12
      %p165 = scmp.lt.s32.totalorder %s12, 3
      %p166 = pnand %p164, %p165
      %p167 = pneg %p166
      // Predicated region
      $region9: #{tpu_custom_call.1} parent=5 // pred_check
        _
      $region10: #{tpu_custom_call.1} parent=5 // pred_check_branch
        %169 = sbr.rel (%p166) target = $region12
      $region11: #{tpu_custom_call.1} parent=5 // pred_region
        %s170 = ssub.s32 %s12, 1
        // Predicated region
        $region13: #{tpu_custom_call.1} parent=11 // pred_check
          %p171 = pneg %p96
        $region14: #{tpu_custom_call.1} parent=11 // pred_check_branch
          %173 = sbr.rel (%p171) target = $region16
        $region15: #{tpu_custom_call.1} parent=11 // pred_region
          %p174 = scmp.lt.s32.totalorder %s23, 0
          %s175 = scalar_select %p174, %s23, 0
          %p176 = scmp.lt.s32.totalorder %s24, 0
          %s177 = scalar_select %p176, %s24, 0
          %s178 = smul.addr %s177, 2
          %s179 = smul.addr %s175, 2
          %s180 = sadd.s32 %s178, %s179
          %s181 = smul.addr %s180, 4
          %s182 = scalar_lea.vmem %s1, %s181
        $region16: #{tpu_custom_call.1} parent=11 // pred_fallthru
          _
        // Predicated region
        $region17: #{tpu_custom_call.1} parent=11 // pred_check
          %p183 = pneg %p124
        $region18: #{tpu_custom_call.1} parent=11 // pred_check_branch
          %185 = sbr.rel (%p183) target = $region20
        $region19: #{tpu_custom_call.1} parent=11 // pred_region
          %p186 = scmp.lt.s32.totalorder %s23, 0
          %s187 = scalar_select %p186, %s23, 0
          %p188 = scmp.lt.s32.totalorder %s24, 0
          %s189 = scalar_select %p188, %s24, 0
          %s190 = smul.addr %s189, 2
          %s191 = smul.addr %s187, 2
          %s192 = sadd.s32 %s190, %s191
          %s193 = smul.addr %s192, 8
          %s194 = scalar_lea.vmem %s2, %s193
        $region20: #{tpu_custom_call.1} parent=11 // pred_fallthru
          _
      $region12: #{tpu_custom_call.1} parent=5 // pred_fallthru
        _
      %p195 = scmp.lt.s32.totalorder %s12, 2
      // Predicated region
      $region21: #{tpu_custom_call.1} parent=5 // pred_check
        %p196 = pneg %p195
      $region22: #{tpu_custom_call.1} parent=5 // pred_check_branch
        %198 = sbr.rel (%p196) target = $region24
      $region23: #{tpu_custom_call.1} parent=5 // pred_region
        // Predicated region
        $region25: #{tpu_custom_call.1} parent=23 // pred_check
          %p199 = pneg %p62
        $region26: #{tpu_custom_call.1} parent=23 // pred_check_branch
          %201 = sbr.rel (%p199) target = $region28
        $region27: #{tpu_custom_call.1} parent=23 // pred_region
          %p202 = scmp.lt.s32.totalorder %s21, 1
          %s203 = scalar_select %p202, %s21, 1
          %p204 = scmp.lt.s32.totalorder %s22, 0
          %s205 = scalar_select %p204, %s22, 0
          %p206 = scmp.lt.s32.totalorder %s19, 0
          %s207 = scalar_select %p206, %s19, 0
          %s208 = smul.addr %s207, 2
          %s209 = smul.addr %s205, 2
          %s210 = sadd.s32 %s208, %s209
          %s211 = smul.addr %s203, 2
          %s212 = sadd.s32 %s210, %s211
          %s213 = scalar_lea.vmem %s0, %s212
        $region28: #{tpu_custom_call.1} parent=23 // pred_fallthru
          _
      $region24: #{tpu_custom_call.1} parent=5 // pred_fallthru
        _
      %p214 = scmp.le.s32.totalorder 1, %s12
      %p215 = scmp.lt.s32.totalorder %s12, 3
      %p216 = pnand %p214, %p215
      %p217 = pneg %p216
      // Predicated region
      $region29: #{tpu_custom_call.1} parent=5 // pred_check
        _
      $region30: #{tpu_custom_call.1} parent=5 // pred_check_branch
        %219 = sbr.rel (%p216) target = $region32
      $region31: #{tpu_custom_call.1} parent=5 // pred_region
        %s220 = ssub.s32 %s12, 1
        %p221 = scmp.lt.s32.totalorder %s25, 1
        %s222 = scalar_select %p221, %s25, 1
        %p223 = scmp.lt.s32.totalorder %s26, 0
        %s224 = scalar_select %p223, %s26, 0
        %p225 = scmp.lt.s32.totalorder %s23, 0
        %s226 = scalar_select %p225, %s23, 0
        %s227 = smul.addr %s226, 2
        %s228 = smul.addr %s224, 2
        %s229 = sadd.s32 %s227, %s228
        %s230 = smul.addr %s222, 2
        %s231 = sadd.s32 %s229, %s230
        %s232 = scalar_lea.vmem %s0, %s231
        %p233 = pneg %p68
        %p234 = pneg %p65
        %p235 = scmp.lt.s32.totalorder %s23, 0
        %s236 = scalar_select %p235, %s23, 0
        %p237 = scmp.lt.s32.totalorder %s24, 0
        %s238 = scalar_select %p237, %s24, 0
        %s239 = smul.addr %s238, 2
        %s240 = smul.addr %s236, 2
        %s241 = sadd.s32 %s239, %s240
        %s242 = smul.addr %s241, 4
        %s243 = scalar_lea.vmem %s1, %s242
        %p244 = pneg %p96
        %p245 = pneg %p93
        %p246 = scmp.lt.s32.totalorder %s23, 0
        %s247 = scalar_select %p246, %s23, 0
        %p248 = scmp.lt.s32.totalorder %s24, 0
        %s249 = scalar_select %p248, %s24, 0
        %s250 = smul.addr %s249, 2
        %s251 = smul.addr %s247, 2
        %s252 = sadd.s32 %s250, %s251
        %s253 = smul.addr %s252, 8
        %s254 = scalar_lea.vmem %s2, %s253
        %p255 = pneg %p124
        %p256 = pneg %p121
        %p257 = pneg %p156
        %p258 = pneg %p153
        %s259 = sand.u32 %s143, 1
        %s260 = scalar_lea.sflag [#allocation3], %s259
        %s261 = sand.u32 %s143, 1
        %s262 = smul.addr %s261, 16
        %s263 = scalar_lea.vmem [#allocation2], %s262
        %p264 = scmp.lt.s32.totalorder %s25, 1
        %s265 = scalar_select %p264, %s25, 1
        %p266 = scmp.lt.s32.totalorder %s26, 0
        %s267 = scalar_select %p266, %s26, 0
        %p268 = scmp.lt.s32.totalorder %s23, 0
        %s269 = scalar_select %p268, %s23, 0
        %s270 = smul.addr %s269, 2
        %s271 = smul.addr %s267, 2
        %s272 = sadd.s32 %s270, %s271
        %s273 = smul.addr %s265, 2
        %s274 = sadd.s32 %s272, %s273
        %s275 = scalar_lea.vmem %s0, %s274
        %p276 = scmp.lt.s32.totalorder %s23, 0
        %s277 = scalar_select %p276, %s23, 0
        %p278 = scmp.lt.s32.totalorder %s24, 0
        %s279 = scalar_select %p278, %s24, 0
        %s280 = smul.addr %s279, 2
        %s281 = smul.addr %s277, 2
        %s282 = sadd.s32 %s280, %s281
        %s283 = smul.addr %s282, 4
        %s284 = scalar_lea.vmem %s1, %s283
        %p285 = scmp.lt.s32.totalorder %s23, 0
        %s286 = scalar_select %p285, %s23, 0
        %p287 = scmp.lt.s32.totalorder %s24, 0
        %s288 = scalar_select %p287, %s24, 0
        %s289 = smul.addr %s288, 2
        %s290 = smul.addr %s286, 2
        %s291 = sadd.s32 %s289, %s290
        %s292 = smul.addr %s291, 8
        %s293 = scalar_lea.vmem %s2, %s292
        %s294 = sadd.s32 %s23, %s24
        %s295 = smul.u32 2, %s294
        %v297 = vld [vmem:[%s275] sm:$0x1]
        %v298 = vld [vmem:[%s275] sm:$0x3]
        %v301 = vunpack.c.l.s4 1966171168
        %v302 = vunpack.c.0.s8 %v301
        %v303 = vlaneseq
        %v304 = vshrl.u32 %v303, 7
        %v305 = vsub.s32 %v302, %v304
        %v306 = vrot.slane %v298, %v305
        %v307 = vcombine.high %v306, %v306
        %v309 = vunpack.c.l.s4 1966171168
        %v310 = vunpack.c.0.s8 %v309
        %v311 = vlaneseq
        %v312 = vshrl.u32 %v311, 7
        %v313 = vsub.s32 %v310, %v312
        %v314 = vrot.slane %v306, %v313
        %v316 = vunpack.c.l.s4 1966171168
        %v317 = vunpack.c.0.s8 %v316
        %v318 = vlaneseq
        %v319 = vshrl.u32 %v318, 7
        %v320 = vsub.s32 %v317, %v319
        %v321 = vrot.slane %v307, %v320
        %v323 = vshll.u32 %v314, 16
        %v326 = vshll.u32 %v321, 16
        %328 = vrot.lane.b32.xlu0 %v323, 127
        %v329 = vpop.permute.xlu0 %328
        %330 = vrot.lane.b32.xlu0 %v326, 127
        %v331 = vpop.permute.xlu0 %330
        %vm332 = vcmask 1039360
        %v333 = vsel %vm332, %v329, %v331
        %v335 = vcombine.low %v298, %v298
        %v337 = vunpack.c.l.s4 1966171168
        %v338 = vunpack.c.0.s8 %v337
        %v339 = vlaneseq
        %v340 = vshrl.u32 %v339, 7
        %v341 = vsub.s32 %v338, %v340
        %v342 = vrot.slane %v335, %v341
        %v343 = vcombine.high %v342, %v342
        %v345 = vunpack.c.l.s4 1966171168
        %v346 = vunpack.c.0.s8 %v345
        %v347 = vlaneseq
        %v348 = vshrl.u32 %v347, 7
        %v349 = vsub.s32 %v346, %v348
        %v350 = vrot.slane %v342, %v349
        %v352 = vunpack.c.l.s4 1966171168
        %v353 = vunpack.c.0.s8 %v352
        %v354 = vlaneseq
        %v355 = vshrl.u32 %v354, 7
        %v356 = vsub.s32 %v353, %v355
        %v357 = vrot.slane %v343, %v356
        %358 = vrot.lane.b32.xlu0 %v350, 126
        %v359 = vpop.permute.xlu0 %358
        %360 = vrot.lane.b32.xlu0 %v357, 126
        %v361 = vpop.permute.xlu0 %360
        %vm362 = vcmask 1031168
        %v363 = vsel %vm362, %v359, %v361
        %v364 = vrot.slane %v323, 7
        %v365 = vrot.slane %v326, 7
        %366 = vrot.lane.b32.xlu0 %v364, 125
        %v367 = vpop.permute.xlu0 %366
        %368 = vrot.lane.b32.xlu0 %v365, 125
        %v369 = vpop.permute.xlu0 %368
        %vm370 = vcmask 1022976
        %v371 = vsel %vm370, %v367, %v369
        %v373 = vcombine.low %v306, %v306
        %v375 = vunpack.c.l.s4 1966171168
        %v376 = vunpack.c.0.s8 %v375
        %v377 = vlaneseq
        %v378 = vshrl.u32 %v377, 7
        %v379 = vsub.s32 %v376, %v378
        %v380 = vrot.slane %v373, %v379
        %381 = vrot.lane.b32.xlu0 %v380, 124
        %v382 = vpop.permute.xlu0 %381
        %383 = vrot.lane.b32.xlu0 %v314, 124
        %v384 = vpop.permute.xlu0 %383
        %vm385 = vcmask 1014784
        %v386 = vsel %vm385, %v382, %v384
        %v387 = vrot.slane %v323, 6
        %v388 = vrot.slane %v326, 6
        %389 = vrot.lane.b32.xlu0 %v387, 123
        %v390 = vpop.permute.xlu0 %389
        %391 = vrot.lane.b32.xlu0 %v388, 123
        %v392 = vpop.permute.xlu0 %391
        %vm393 = vcmask 1006592
        %v394 = vsel %vm393, %v390, %v392
        %v396 = vcombine.low %v342, %v342
        %v398 = vunpack.c.l.s4 1966171168
        %v399 = vunpack.c.0.s8 %v398
        %v400 = vlaneseq
        %v401 = vshrl.u32 %v400, 7
        %v402 = vsub.s32 %v399, %v401
        %v403 = vrot.slane %v396, %v402
        %404 = vrot.lane.b32.xlu0 %v403, 122
        %v405 = vpop.permute.xlu0 %404
        %406 = vrot.lane.b32.xlu0 %v350, 122
        %v407 = vpop.permute.xlu0 %406
        %vm408 = vcmask 998400
        %v409 = vsel %vm408, %v405, %v407
        %v410 = vrot.slane %v323, 5
        %v411 = vrot.slane %v326, 5
        %412 = vrot.lane.b32.xlu0 %v410, 121
        %v413 = vpop.permute.xlu0 %412
        %414 = vrot.lane.b32.xlu0 %v411, 121
        %v415 = vpop.permute.xlu0 %414
        %vm416 = vcmask 990208
        %v417 = vsel %vm416, %v413, %v415
        %v419 = vcombine.low %v314, %v314
        %v420 = vcombine.low %v321, %v321
        %421 = vrot.lane.b32.xlu0 %v419, 120
        %v422 = vpop.permute.xlu0 %421
        %423 = vrot.lane.b32.xlu0 %v420, 120
        %v424 = vpop.permute.xlu0 %423
        %vm425 = vcmask 982016
        %v426 = vsel %vm425, %v422, %v424
        %v427 = vrot.slane %v323, 4
        %v428 = vrot.slane %v326, 4
        %429 = vrot.lane.b32.xlu0 %v427, 119
        %v430 = vpop.permute.xlu0 %429
        %431 = vrot.lane.b32.xlu0 %v428, 119
        %v432 = vpop.permute.xlu0 %431
        %vm433 = vcmask 973824
        %v434 = vsel %vm433, %v430, %v432
        %v436 = vcombine.low %v350, %v350
        %v437 = vcombine.low %v357, %v357
        %438 = vrot.lane.b32.xlu0 %v436, 118
        %v439 = vpop.permute.xlu0 %438
        %440 = vrot.lane.b32.xlu0 %v437, 118
        %v441 = vpop.permute.xlu0 %440
        %vm442 = vcmask 965632
        %v443 = vsel %vm442, %v439, %v441
        %v444 = vrot.slane %v323, 3
        %v445 = vrot.slane %v326, 3
        %446 = vrot.lane.b32.xlu0 %v444, 117
        %v447 = vpop.permute.xlu0 %446
        %448 = vrot.lane.b32.xlu0 %v445, 117
        %v449 = vpop.permute.xlu0 %448
        %vm450 = vcmask 957440
        %v451 = vsel %vm450, %v447, %v449
        %v453 = vcombine.low %v380, %v380
        %454 = vrot.lane.b32.xlu0 %v453, 116
        %v455 = vpop.permute.xlu0 %454
        %456 = vrot.lane.b32.xlu0 %v419, 116
        %v457 = vpop.permute.xlu0 %456
        %vm458 = vcmask 949248
        %v459 = vsel %vm458, %v455, %v457
        %v460 = vrot.slane %v323, 2
        %v461 = vrot.slane %v326, 2
        %462 = vrot.lane.b32.xlu0 %v460, 115
        %v463 = vpop.permute.xlu0 %462
        %464 = vrot.lane.b32.xlu0 %v461, 115
        %v465 = vpop.permute.xlu0 %464
        %vm466 = vcmask 941056
        %v467 = vsel %vm466, %v463, %v465
        %v469 = vcombine.low %v403, %v403
        %470 = vrot.lane.b32.xlu0 %v469, 114
        %v471 = vpop.permute.xlu0 %470
        %472 = vrot.lane.b32.xlu0 %v436, 114
        %v473 = vpop.permute.xlu0 %472
        %vm474 = vcmask 932864
        %v475 = vsel %vm474, %v471, %v473
        %vm476 = vcmask 1040384
        %vm477 = vsmask.f32 256
        %vm478 = vmand %vm476, %vm477
        %v479 = vsel %vm478, %v297, %v333
        %vm480 = vcmask 1040384
        %v483 = vsel %vm480, %v479, %v363
        %vm485 = vcmask 1041408
        %vm486 = vsmask.f32 1280
        %vm487 = vmand %vm485, %vm486
        %v488 = vsel %vm487, %v483, %v371
        %vm489 = vcmask 1041408
        %v492 = vsel %vm489, %v488, %v386
        %vm494 = vcmask 1042432
        %vm495 = vsmask.f32 2304
        %vm496 = vmand %vm494, %vm495
        %v497 = vsel %vm496, %v492, %v394
        %vm498 = vcmask 1042432
        %v501 = vsel %vm498, %v497, %v409
        %vm503 = vcmask 1043456
        %vm504 = vsmask.f32 3328
        %vm505 = vmand %vm503, %vm504
        %v506 = vsel %vm505, %v501, %v417
        %vm507 = vcmask 1043456
        %v510 = vsel %vm507, %v506, %v426
        %vm512 = vcmask 1044480
        %vm513 = vsmask.f32 4352
        %vm514 = vmand %vm512, %vm513
        %v515 = vsel %vm514, %v510, %v434
        %vm516 = vcmask 1044480
        %v519 = vsel %vm516, %v515, %v443
        %vm521 = vcmask 1045504
        %vm522 = vsmask.f32 5376
        %vm523 = vmand %vm521, %vm522
        %v524 = vsel %vm523, %v519, %v451
        %vm525 = vcmask 1045504
        %v528 = vsel %vm525, %v524, %v459
        %vm530 = vcmask 1046528
        %vm531 = vsmask.f32 6400
        %vm532 = vmand %vm530, %vm531
        %v533 = vsel %vm532, %v528, %v467
        %vm534 = vcmask 1046528
        %v537 = vsel %vm534, %v533, %v475
        %v538 = vld [vmem:[%s284] sm:$0xf]
        %v539 = vld [vmem:[%s284 + $0x4] sm:$0xf]
        %v540 = vld [vmem:[%s293] sm:$0xff]
        %v541 = vld [vmem:[%s293 + $0x8] sm:$0xff]
        %543 = vset.pattern.permute.xlu0 0
        %544 = vperm.xlu0 %543, %v540
        %v545 = vpop.permute.xlu0 %544
        %548 = vset.pattern.permute.xlu0 0
        %549 = vperm.xlu0 %548, %v541
        %v550 = vpop.permute.xlu0 %549
        %v554 = vunpack.c.l.b16 %v538
        %v555 = vunpack.c.l.b16 %v539
        %v556 = vpack.c.b16 %v555, %v554
        %vm557 = vcmask 121856
        %v559 = vsel %vm557, %v556, 0
        %vm561 = vcmask 1047552
        %v562 = vsel %vm534, 4294967295, 65535
        %v563 = vsel %vm561, %v562, 0
        %v564 = vand.u32 %v537, %v563
        %566 = vmatprep.subr.bf16.mxu0 0
        %567 = vmatpush1.bf16.msra.mxu0 0
        %568 = vmatprep.subr.bf16.mxu0 0
        %569 = vmatpush1.bf16.msra.mxu0 0
        %570 = vmatprep.subr.bf16.mxu0 0
        %571 = vmatpush1.bf16.msra.mxu0 0
        %572 = vmatprep.subr.bf16.mxu0 0
        %573 = vmatpush1.bf16.msra.mxu0 0
        %574 = vmatprep.subr.bf16.mxu0 0
        %575 = vmatpush1.bf16.msra.mxu0 0
        %576 = vmatprep.subr.bf16.mxu0 0
        %577 = vmatpush1.bf16.msra.mxu0 0
        %578 = vmatprep.subr.bf16.mxu0 0
        %579 = vmatpush1.bf16.msra.mxu0 0
        %580 = vmatprep.subr.bf16.mxu0 0
        %581 = vmatpush1.bf16.msra.mxu0 %v564
        %582 = vmatprep.subr.bf16.mxu0 0
        %583 = vmatpush2.bf16.msra.mxu0 0
        %584 = vmatprep.subr.bf16.mxu0 0
        %585 = vmatpush2.bf16.msra.mxu0 0
        %586 = vmatprep.subr.bf16.mxu0 0
        %587 = vmatpush2.bf16.msra.mxu0 0
        %588 = vmatprep.subr.bf16.mxu0 0
        %589 = vmatpush2.bf16.msra.mxu0 0
        %590 = vmatprep.subr.bf16.mxu0 0
        %591 = vmatpush2.bf16.msra.mxu0 0
        %592 = vmatprep.subr.bf16.mxu0 0
        %593 = vmatpush2.bf16.msra.mxu0 0
        %594 = vmatprep.subr.bf16.mxu0 0
        %595 = vmatpush2.bf16.msra.mxu0 0
        %596 = vmatprep.subr.bf16.mxu0 0
        %597 = vmatpush2.bf16.msra.mxu0 0
        %598 = vmatprep.mubr.bf16.mxu0 0
        %599 = vmatmul.mubr.bf16.gmra.mxu0 %v559
        %v600 = vpop.f32.mrf.mxu0
        %v601 = vadd.f32 %v545, %v600
        %v602 = vpop.f32.mrf.mxu0
        %v603 = vpop.f32.mrf.mxu0
        %v604 = vadd.f32 %v550, %v603
        %v605 = vpop.f32.mrf.mxu0
        %606 = vdwg.mxu0
        %607 = vst [vmem:[%s263] sm:$0xff] %v601
        %608 = vst [vmem:[%s263 + $0x8] sm:$0xff] %v604
        %s609 = sand.u32 %s143, 1
        %s610 = scalar_lea.sflag [#allocation3], %s609
        %s611 = sand.u32 %s143, 1
        %s612 = smul.addr %s611, 16
        %s613 = scalar_lea.vmem [#allocation2], %s612
        // Predicated region
        $region33: #{tpu_custom_call.1} parent=31 // pred_check
          %p614 = pneg %p153
        $region34: #{tpu_custom_call.1} parent=31 // pred_check_branch
          %616 = sbr.rel (%p614) target = $region36
        $region35: #{tpu_custom_call.1} parent=31 // pred_region
          %s617 = sadd.s32 %s23, %s24
          %s618 = smul.u32 2, %s617
          %s620 = ssub.s32 256, 256
          %621 = vsyncadd %s610, %s620
          %s622 = sadd.s32 %s26, %s618
          %s623 = smul.addr %s25, 2
          %s624 = sadd.s32 %s622, %s623
          %s625 = smul.addr %s624, 128
          %s626 = scalar_lea.hbm %s3, %s625
          %s627 = sshll.u32 %s613, 4
          %s628 = int_to_ptr.vmem [resolvable:$true] %s627
          %633 = dma.vmem_to_hbm [thread:$0]  %s628, 256, %s626, %s610, 128, 128, 8
        $region36: #{tpu_custom_call.1} parent=31 // pred_fallthru
          _
      $region32: #{tpu_custom_call.1} parent=5 // pred_fallthru
        _
      %p634 = scmp.le.s32.totalorder 2, %s12
      // Predicated region
      $region37: #{tpu_custom_call.1} parent=5 // pred_check
        %p635 = pneg %p634
      $region38: #{tpu_custom_call.1} parent=5 // pred_check_branch
        %637 = sbr.rel (%p635) target = $region40
      $region39: #{tpu_custom_call.1} parent=5 // pred_region
        %s638 = ssub.s32 %s12, 2
        // Predicated region
        $region41: #{tpu_custom_call.1} parent=39 // pred_check
          %p639 = pneg %p159
        $region42: #{tpu_custom_call.1} parent=39 // pred_check_branch
          %641 = sbr.rel (%p639) target = $region44
        $region43: #{tpu_custom_call.1} parent=39 // pred_region
          %s642 = sand.u32 %s144, 1
          %s643 = scalar_lea.sflag [#allocation3], %s642
          %s644 = sand.u32 %s144, 1
          %s645 = smul.addr %s644, 16
          %s646 = scalar_lea.vmem [#allocation2], %s645
          %647 = dma.done %s643, 256
        $region44: #{tpu_custom_call.1} parent=39 // pred_fallthru
          _
      $region40: #{tpu_custom_call.1} parent=5 // pred_fallthru
        _
    $region6: #{tpu_custom_call.1} parent=1 // loop_footer
      %s16 = sadd.s32 1, %s12
    $region7: #{tpu_custom_call.1} parent=1 // loop_footer_branch
      %11 = sbr.rel target = $region3
    $region8: #{tpu_custom_call.1} parent=1 // loop_exit
      _
    %648 = vsyncpa [#allocation3], 1
    %s649 = scalar_lea.sflag [#allocation3], 1
    %650 = vsyncpa %s649, 1

</llo_original>
